<compile_context>
chip_gen: v7x
topology: tpu7x:2x2x1
jax: 0.10.0
libtpu: 0.0.40
codegen_flags: <defaults>
</compile_context>

<pallas_src>
import functools

import jax
import jax.numpy as jnp
from jax.experimental import pallas as pl
from jax.experimental.pallas import tpu as pltpu


def rbfnet_kernel(xt_ref, c_ref, csq_ref, nis_ref, w_ref, b_ref, ot_ref,
                  *, bf16_matmul: bool):
    """Fused RBF layer + Linear head, transposed layout (N on lanes).

    xt_ref : [D, TN]  input tile (x transposed)
    c_ref  : [C, D]   RBF centres (resident)
    csq_ref: [C, 1]   precomputed ||centre||^2 (resident)
    nis_ref: [C, 1]   precomputed -1/sigma^2 = -exp(-2*log_sigma) (resident)
    w_ref  : [O, C]   fc2 weight (resident)
    b_ref  : [O, 1]   fc2 bias (resident)
    ot_ref : [O, TN]  output tile (transposed)
    """
    xt = xt_ref[...]                                              # [D, TN] f32

    if bf16_matmul:
        # Optional MXU speedup on v6e/v7x; correction terms stay in f32.
        xc = jnp.dot(c_ref[...].astype(jnp.bfloat16),
                     xt.astype(jnp.bfloat16),
                     preferred_element_type=jnp.float32)          # [C, TN]
    else:
        xc = jnp.dot(c_ref[...], xt,
                     preferred_element_type=jnp.float32)          # [C, TN]

    x_sq = jnp.sum(xt * xt, axis=0, keepdims=True)                # [1, TN]
    d2 = jnp.maximum(csq_ref[...] + x_sq - 2.0 * xc, 0.0)         # [C, TN]
    phi = jnp.exp(d2 * nis_ref[...])                              # [C, TN]  (EUP)

    out = jnp.dot(w_ref[...], phi,
                  preferred_element_type=jnp.float32) + b_ref[...]  # [O, TN]
    ot_ref[...] = out.astype(ot_ref.dtype)


def rbfnet_forward(x, centres, log_sigmas, w, b, *,
                   tn_max: int = 512, bf16_matmul: bool = False):
    """x:[N,D], centres:[C,D], log_sigmas:[C], w:[O,C], b:[O] -> [N,O]."""
    N, D = x.shape
    C, _ = centres.shape
    O = w.shape[0]

    # Lane tile along N: multiple of 128, capped, and N padded up to it.
    tn = min(tn_max, pl.cdiv(N, 128) * 128)
    n_pad = pl.cdiv(N, tn) * tn
    grid = (n_pad // tn,)

    # ---- Hoisted, x-independent precompute (f32) ----
    x32 = x.astype(jnp.float32)
    c32 = centres.astype(jnp.float32)
    xt = jnp.pad(x32.T, ((0, 0), (0, n_pad - N)))                 # [D, n_pad]
    c_sq = jnp.sum(c32 * c32, axis=1, keepdims=True)              # [C, 1]
    neg_inv_sig2 = -jnp.exp(-2.0 * log_sigmas.astype(jnp.float32)).reshape(C, 1)
    w2 = w.astype(jnp.float32)                                    # [O, C]
    b2 = b.astype(jnp.float32).reshape(O, 1)                      # [O, 1]

    # ---- VMEM budget (sized for the smallest generation, v7x = 64 MiB) ----
    f32b = 4
    resident = (C * D + 2 * C + O * C + O) * f32b
    per_step_io = 2 * (D * tn + O * tn) * f32b                    # double-buffered tiles
    intermediates = 4 * C * tn * f32b                             # xc/d2/phi live tiles
    vmem_limit = int(min(max(resident + per_step_io + intermediates + (2 << 20),
                             16 << 20), 64 << 20))

    cost = pl.CostEstimate(
        flops=2 * n_pad * C * D + 2 * n_pad * C * O,
        transcendentals=n_pad * C,
        bytes_accessed=(n_pad * D + C * D + 2 * C + O * C + O + O * n_pad) * f32b,
    )

    out_t = pl.pallas_call(
        functools.partial(rbfnet_kernel, bf16_matmul=bf16_matmul),
        out_shape=jax.ShapeDtypeStruct((O, n_pad), jnp.float32),
        grid=grid,
        in_specs=[
            pl.BlockSpec((D, tn), lambda i: (0, i)),   # x tile (pipelined)
            pl.BlockSpec((C, D), lambda i: (0, 0)),    # centres (resident)
            pl.BlockSpec((C, 1), lambda i: (0, 0)),    # ||c||^2 (resident)
            pl.BlockSpec((C, 1), lambda i: (0, 0)),    # -1/sigma^2 (resident)
            pl.BlockSpec((O, C), lambda i: (0, 0)),    # fc2 weight (resident)
            pl.BlockSpec((O, 1), lambda i: (0, 0)),    # fc2 bias (resident)
        ],
        out_specs=pl.BlockSpec((O, tn), lambda i: (0, i)),  # lane-dense output tile
        compiler_params=pltpu.CompilerParams(
            dimension_semantics=("parallel",),
            vmem_limit_bytes=vmem_limit,
        ),
        cost_estimate=cost,
    )(xt, c32, c_sq, neg_inv_sig2, w2, b2)

    return out_t.T[:N, :]                                         # [N, O]


def rbfnet_reference(x, centres, log_sigmas, w, b):
    # Pure-JAX reference mirroring the PyTorch RBF layer exactly.
    diff = x[:, None, :] - centres[None, :, :]                    # [N, C, D]
    dist = jnp.sqrt(jnp.sum(diff * diff, axis=-1))                # [N, C]
    dist = dist / jnp.exp(log_sigmas)[None, :]
    phi = jnp.exp(-(dist ** 2))                                   # gaussian
    return phi @ w.T + b[None, :]


if __name__ == "__main__":
    # Module hyperparameters (2D regression: 2 input neurons -> 1 output).
    input_neurons = 2
    layer_centers = 32
    output_neurons = 1
    batch = 8

    key = jax.random.PRNGKey(0)
    kx, kc, kw, kb = jax.random.split(key, 4)

    # Inputs.
    x = jax.random.normal(kx, (batch, input_neurons), dtype=jnp.float32)

    # RBF layer params (PyTorch init: centres ~ N(0,1), log_sigmas = 0).
    centres = jax.random.normal(kc, (layer_centers, input_neurons), dtype=jnp.float32)
    log_sigmas = jnp.zeros((layer_centers,), dtype=jnp.float32)

    # Linear layer params (PyTorch init: U(-1/sqrt(C), 1/sqrt(C))).
    bound = 1.0 / jnp.sqrt(layer_centers)
    w = jax.random.uniform(kw, (output_neurons, layer_centers),
                           minval=-bound, maxval=bound, dtype=jnp.float32)
    b = jax.random.uniform(kb, (output_neurons,),
                           minval=-bound, maxval=bound, dtype=jnp.float32)

    out = rbfnet_forward(x, centres, log_sigmas, w, b)
    out = jax.block_until_ready(out)

    ref = rbfnet_reference(x, centres, log_sigmas, w, b)
    assert out.shape == (batch, output_neurons)
    assert jnp.allclose(out, ref, atol=1e-5, rtol=1e-5), (out, ref)

    print("KERNEL_OK")
</pallas_src>

<mosaic_0001>
module attributes {stable_mosaic.version = 11 : i64} {
  func.func @rbfnet_kernel(%arg0: i32, %arg1: memref<2x128xf32, #tpu.memory_space<vmem>>, %arg2: memref<32x2xf32, #tpu.memory_space<vmem>>, %arg3: memref<32x1xf32, #tpu.memory_space<vmem>>, %arg4: memref<32x1xf32, #tpu.memory_space<vmem>>, %arg5: memref<1x32xf32, #tpu.memory_space<vmem>>, %arg6: memref<1x1xf32, #tpu.memory_space<vmem>>, %arg7: memref<1x128xf32, #tpu.memory_space<vmem>>) attributes {dimension_semantics = [#tpu.dimension_semantics<parallel>], iteration_bounds = array<i64: 1>, scalar_prefetch = 0 : i64, scratch_operands = 0 : i64, tpu.core_type = #tpu.core_type<tc>, window_params = [{transform_indices = @transform_0, window_bounds = array<i64: 2, 128>}, {pipeline_mode = #tpu.pipeline_mode<synchronous>, transform_indices = @transform_1, window_bounds = array<i64: 32, 2>}, {pipeline_mode = #tpu.pipeline_mode<synchronous>, transform_indices = @transform_2, window_bounds = array<i64: 32, 1>}, {pipeline_mode = #tpu.pipeline_mode<synchronous>, transform_indices = @transform_3, window_bounds = array<i64: 32, 1>}, {pipeline_mode = #tpu.pipeline_mode<synchronous>, transform_indices = @transform_4, window_bounds = array<i64: 1, 32>}, {pipeline_mode = #tpu.pipeline_mode<synchronous>, transform_indices = @transform_5, window_bounds = array<i64: 1, 1>}, {transform_indices = @transform_6, window_bounds = array<i64: 1, 128>}]} {
    %c0 = arith.constant 0 : index
    %c0_0 = arith.constant 0 : index
    %0 = vector.load %arg1[%c0, %c0_0] : memref<2x128xf32, #tpu.memory_space<vmem>>, vector<2x128xf32>
    %c0_1 = arith.constant 0 : index
    %c0_2 = arith.constant 0 : index
    %1 = vector.load %arg2[%c0_1, %c0_2] : memref<32x2xf32, #tpu.memory_space<vmem>>, vector<32x2xf32>
    %cst = arith.constant dense<0.000000e+00> : vector<32x128xf32>
    %2 = tpu.matmul %1, %0, %cst {dimension_numbers = #tpu.dot_dimension_numbers<[1], [0], [0], [1], [0, 0, 1, 1], [], []>} : vector<32x2xf32>, vector<2x128xf32>, vector<32x128xf32> -> vector<32x128xf32>
    %3 = arith.mulf %0, %0 : vector<2x128xf32>
    %cst_3 = arith.constant dense<0.000000e+00> : vector<128xf32>
    %4 = vector.multi_reduction <add>, %3, %cst_3 [0] : vector<2x128xf32> to vector<128xf32>
    %5 = vector.shape_cast %4 : vector<128xf32> to vector<1x128xf32>
    %c0_4 = arith.constant 0 : index
    %c0_5 = arith.constant 0 : index
    %6 = vector.load %arg3[%c0_4, %c0_5] : memref<32x1xf32, #tpu.memory_space<vmem>>, vector<32x1xf32>
    %7 = vector.broadcast %6 : vector<32x1xf32> to vector<32x128xf32>
    %8 = vector.broadcast %5 : vector<1x128xf32> to vector<32x128xf32>
    %9 = arith.addf %7, %8 : vector<32x128xf32>
    %cst_6 = arith.constant 2.000000e+00 : f32
    %10 = vector.broadcast %cst_6 : f32 to vector<32x128xf32>
    %11 = arith.mulf %10, %2 : vector<32x128xf32>
    %12 = arith.subf %9, %11 : vector<32x128xf32>
    %cst_7 = arith.constant 0.000000e+00 : f32
    %13 = vector.broadcast %cst_7 : f32 to vector<32x128xf32>
    %14 = arith.maximumf %12, %13 : vector<32x128xf32>
    %c0_8 = arith.constant 0 : index
    %c0_9 = arith.constant 0 : index
    %15 = vector.load %arg4[%c0_8, %c0_9] : memref<32x1xf32, #tpu.memory_space<vmem>>, vector<32x1xf32>
    %16 = vector.broadcast %15 : vector<32x1xf32> to vector<32x128xf32>
    %17 = arith.mulf %14, %16 : vector<32x128xf32>
    %18 = math.exp %17 : vector<32x128xf32>
    %c0_10 = arith.constant 0 : index
    %c0_11 = arith.constant 0 : index
    %19 = vector.load %arg5[%c0_10, %c0_11] : memref<1x32xf32, #tpu.memory_space<vmem>>, vector<1x32xf32>
    %cst_12 = arith.constant dense<0.000000e+00> : vector<1x128xf32>
    %20 = tpu.matmul %19, %18, %cst_12 {dimension_numbers = #tpu.dot_dimension_numbers<[1], [0], [0], [1], [0, 0, 1, 1], [], []>} : vector<1x32xf32>, vector<32x128xf32>, vector<1x128xf32> -> vector<1x128xf32>
    %c0_13 = arith.constant 0 : index
    %c0_14 = arith.constant 0 : index
    %21 = vector.load %arg6[%c0_13, %c0_14] : memref<1x1xf32, #tpu.memory_space<vmem>>, vector<1x1xf32>
    %22 = vector.broadcast %21 : vector<1x1xf32> to vector<1x128xf32>
    %23 = arith.addf %20, %22 : vector<1x128xf32>
    %c0_15 = arith.constant 0 : index
    %c0_16 = arith.constant 0 : index
    %24 = vector.load %arg7[%c0_15, %c0_16] : memref<1x128xf32, #tpu.memory_space<vmem>>, vector<1x128xf32>
    tpu.vector_store %arg7[%c0_15, %c0_16], %23 {strides = array<i32>} : memref<1x128xf32, #tpu.memory_space<vmem>>, vector<1x128xf32>,
    return
  }
  func.func @transform_0(%arg0: i32) -> (i32, i32) {
    %c0_i32 = arith.constant 0 : i32
    %c0_i32_0 = arith.constant 0 : i32
    return %c0_i32, %arg0 : i32, i32
  }
  func.func @transform_1(%arg0: i32) -> (i32, i32) {
    %c0_i32 = arith.constant 0 : i32
    %c0_i32_0 = arith.constant 0 : i32
    %c0_i32_1 = arith.constant 0 : i32
    return %c0_i32, %c0_i32_0 : i32, i32
  }
  func.func @transform_2(%arg0: i32) -> (i32, i32) {
    %c0_i32 = arith.constant 0 : i32
    %c0_i32_0 = arith.constant 0 : i32
    %c0_i32_1 = arith.constant 0 : i32
    return %c0_i32, %c0_i32_0 : i32, i32
  }
  func.func @transform_3(%arg0: i32) -> (i32, i32) {
    %c0_i32 = arith.constant 0 : i32
    %c0_i32_0 = arith.constant 0 : i32
    %c0_i32_1 = arith.constant 0 : i32
    return %c0_i32, %c0_i32_0 : i32, i32
  }
  func.func @transform_4(%arg0: i32) -> (i32, i32) {
    %c0_i32 = arith.constant 0 : i32
    %c0_i32_0 = arith.constant 0 : i32
    %c0_i32_1 = arith.constant 0 : i32
    return %c0_i32, %c0_i32_0 : i32, i32
  }
  func.func @transform_5(%arg0: i32) -> (i32, i32) {
    %c0_i32 = arith.constant 0 : i32
    %c0_i32_0 = arith.constant 0 : i32
    %c0_i32_1 = arith.constant 0 : i32
    return %c0_i32, %c0_i32_0 : i32, i32
  }
  func.func @transform_6(%arg0: i32) -> (i32, i32) {
    %c0_i32 = arith.constant 0 : i32
    %c0_i32_0 = arith.constant 0 : i32
    return %c0_i32, %arg0 : i32, i32
  }
}

</mosaic_0001>

<llo_original>
// kernel: tpu_custom_call.1
$region0: #{tpu_custom_call.1}
  #allocation0 [shape = 'u32[]', space=smem, size = 0x4, offset = 0x4, fixed_abs, tag = 'smem constant byte address 0x4 - core index']
  #allocation1 [shape = 'u32[144,128]{1,0:T(1,128)}', space=vmem, size = 0x12000, scoped, tag = 'internal scratch']
  #allocation2 [shape = 'f32[1,1]{1,0:T(1,128)S(1)}', space=vmem, size = 0x200, scoped, tag = 'scoped memory for tpu_custom_call.1']
  %s0 = inlined_call_operand.vmem [shape: f32[2,128], index: 0, kind: input, shape index: {}]
  %s1 = inlined_call_operand.vmem [shape: f32[32,2], index: 1, kind: input, shape index: {}]
  %s2 = inlined_call_operand.vmem [shape: f32[32,1], index: 2, kind: input, shape index: {}]
  %s3 = inlined_call_operand.vmem [shape: f32[32,1], index: 3, kind: input, shape index: {}]
  %s4 = inlined_call_operand.vmem [shape: f32[1,32], index: 4, kind: input, shape index: {}]
  %s5 = inlined_call_operand.<no memory space> [shape: f32[1,1], index: 5, kind: input, shape index: {}]
  %s6 = inlined_call_operand.hbm [shape: f32[1,128], index: 6, kind: output, shape index: {}]
  %s7 = sld [smem:[#allocation0]]
  $region34: #{tpu_custom_call.1} parent=0
    _
  %s9 = ssub.s32 1, %s7
  %s10 = scalar_select 0, %s9, %s7
  %v11 = vstv %s5
  %12 = vst [vmem:[#allocation2] sm:$0x1] %v11
  $region1: #{tpu_custom_call.1} parent=0
    #allocation3 [shape = 'u8[512]{0}', space=vmem, size = 0x400, scoped, tag = 'output window, operand 0, single buffered']
    #allocation4 [shape = 's32[1]{0}', space=sflag, size = 0x4, scoped, tag = 'scoped memory for tpu_custom_call.1']
    %13 = vsyncpa [#allocation4], 0
    // Predicated region
    $region2: #{tpu_custom_call.1} parent=1 // pred_check
      _
    $region3: #{tpu_custom_call.1} parent=1 // pred_check_branch
      %15 = sbr.rel (0) target = $region5
    $region4: #{tpu_custom_call.1} parent=1 // pred_region
      _
    $region5: #{tpu_custom_call.1} parent=1 // pred_fallthru
      _
    // Predicated region
    $region6: #{tpu_custom_call.1} parent=1 // pred_check
      _
    $region7: #{tpu_custom_call.1} parent=1 // pred_check_branch
      %17 = sbr.rel (0) target = $region9
    $region8: #{tpu_custom_call.1} parent=1 // pred_region
      _
    $region9: #{tpu_custom_call.1} parent=1 // pred_fallthru
      _
    // Predicated region
    $region10: #{tpu_custom_call.1} parent=1 // pred_check
      _
    $region11: #{tpu_custom_call.1} parent=1 // pred_check_branch
      %19 = sbr.rel (0) target = $region13
    $region12: #{tpu_custom_call.1} parent=1 // pred_region
      _
    $region13: #{tpu_custom_call.1} parent=1 // pred_fallthru
      _
    // Predicated region
    $region14: #{tpu_custom_call.1} parent=1 // pred_check
      _
    $region15: #{tpu_custom_call.1} parent=1 // pred_check_branch
      %21 = sbr.rel (0) target = $region17
    $region16: #{tpu_custom_call.1} parent=1 // pred_region
      _
    $region17: #{tpu_custom_call.1} parent=1 // pred_fallthru
      _
    // Predicated region
    $region18: #{tpu_custom_call.1} parent=1 // pred_check
      _
    $region19: #{tpu_custom_call.1} parent=1 // pred_check_branch
      %23 = sbr.rel (0) target = $region21
    $region20: #{tpu_custom_call.1} parent=1 // pred_region
      _
    $region21: #{tpu_custom_call.1} parent=1 // pred_fallthru
      _
    // Predicated region
    $region22: #{tpu_custom_call.1} parent=1 // pred_check
      _
    $region23: #{tpu_custom_call.1} parent=1 // pred_check_branch
      %25 = sbr.rel (0) target = $region25
    $region24: #{tpu_custom_call.1} parent=1 // pred_region
      _
    $region25: #{tpu_custom_call.1} parent=1 // pred_fallthru
      _
    %v26 = vld [vmem:[%s0] sm:$0x3]
    %v27 = vld [vmem:[%s1] sm:$0xff]
    %v28 = vld [vmem:[%s1 + $0x8] sm:$0xff]
    %v29 = vld [vmem:[%s1 + $0x10] sm:$0xff]
    %v30 = vld [vmem:[%s1 + $0x18] sm:$0xff]
    %vm31 = vcmask 15360
    %v33 = vsel %vm31, %v27, 0
    %v36 = vsel %vm31, %v28, 0
    %v39 = vsel %vm31, %v29, 0
    %v42 = vsel %vm31, %v30, 0
    %vm44 = vcmask 1041408
    %v46 = vsel %vm44, %v26, 0
    %48 = vmatprep.subr.mxu0 0.0
    %49 = vmatpush1.msra.mxu0 %v46
    %50 = vmatprep.subr.mxu0 0.0
    %51 = vmatpush1.msra.mxu0 0.0
    %52 = vmatprep.subr.mxu0 0.0
    %53 = vmatpush1.msra.mxu0 0.0
    %54 = vmatprep.subr.mxu0 0.0
    %55 = vmatpush1.msra.mxu0 0.0
    %56 = vmatprep.subr.mxu0 0.0
    %57 = vmatpush1.msra.mxu0 0.0
    %58 = vmatprep.subr.mxu0 0.0
    %59 = vmatpush1.msra.mxu0 0.0
    %60 = vmatprep.subr.mxu0 0.0
    %61 = vmatpush1.msra.mxu0 0.0
    %62 = vmatprep.subr.mxu0 0.0
    %63 = vmatpush1.msra.mxu0 0.0
    %64 = vmatprep.subr.mxu0 0.0
    %65 = vmatpush1.msra.mxu0 0.0
    %66 = vmatprep.subr.mxu0 0.0
    %67 = vmatpush1.msra.mxu0 0.0
    %68 = vmatprep.subr.mxu0 0.0
    %69 = vmatpush1.msra.mxu0 0.0
    %70 = vmatprep.subr.mxu0 0.0
    %71 = vmatpush1.msra.mxu0 0.0
    %72 = vmatprep.subr.mxu0 0.0
    %73 = vmatpush1.msra.mxu0 0.0
    %74 = vmatprep.subr.mxu0 0.0
    %75 = vmatpush1.msra.mxu0 0.0
    %76 = vmatprep.subr.mxu0 0.0
    %77 = vmatpush1.msra.mxu0 0.0
    %78 = vmatprep.subr.mxu0 0.0
    %79 = vmatpush1.msra.mxu0 0.0
    %80 = vmatprep.subr.mxu0 0.0
    %81 = vmatpush1.msra.mxu0 0.0
    %82 = vmatprep.subr.mxu0 0.0
    %83 = vmatpush1.msra.mxu0 0.0
    %84 = vmatprep.subr.mxu0 0.0
    %85 = vmatpush1.msra.mxu0 0.0
    %86 = vmatprep.subr.mxu0 0.0
    %87 = vmatpush1.msra.mxu0 0.0
    %88 = vmatprep.subr.mxu0 0.0
    %89 = vmatpush1.msra.mxu0 0.0
    %90 = vmatprep.subr.mxu0 0.0
    %91 = vmatpush1.msra.mxu0 0.0
    %92 = vmatprep.subr.mxu0 0.0
    %93 = vmatpush1.msra.mxu0 0.0
    %94 = vmatprep.subr.mxu0 0.0
    %95 = vmatpush1.msra.mxu0 0.0
    %96 = vmatprep.subr.mxu0 0.0
    %97 = vmatpush1.msra.mxu0 0.0
    %98 = vmatprep.subr.mxu0 0.0
    %99 = vmatpush1.msra.mxu0 0.0
    %100 = vmatprep.subr.mxu0 0.0
    %101 = vmatpush1.msra.mxu0 0.0
    %102 = vmatprep.subr.mxu0 0.0
    %103 = vmatpush1.msra.mxu0 0.0
    %104 = vmatprep.subr.mxu0 0.0
    %105 = vmatpush1.msra.mxu0 0.0
    %106 = vmatprep.subr.mxu0 0.0
    %107 = vmatpush1.msra.mxu0 0.0
    %108 = vmatprep.subr.mxu0 0.0
    %109 = vmatpush1.msra.mxu0 0.0
    %110 = vmatprep.subr.mxu0 0.0
    %111 = vmatpush1.msra.mxu0 0.0
    %112 = vmatprep.mubr.f32.mxu0 0.0
    %113 = vmatmul.mubr.f32.gmra.mrb[0].mxu0 %v33
    %v114 = vpop.f32.mrb[0].mxu0
    %v115 = vadd.f32 0.0, %v114
    %v116 = vpop.f32.mrb[0].mxu0
    %117 = vmatprep.mubr.f32.mxu0 0.0
    %118 = vmatmul.mubr.f32.gmra.mrb[0].mxu0 %v36
    %v119 = vpop.f32.mrb[0].mxu0
    %v120 = vadd.f32 0.0, %v119
    %v121 = vpop.f32.mrb[0].mxu0
    %122 = vmatprep.mubr.f32.mxu0 0.0
    %123 = vmatmul.mubr.f32.gmra.mrb[0].mxu0 %v39
    %v124 = vpop.f32.mrb[0].mxu0
    %v125 = vadd.f32 0.0, %v124
    %v126 = vpop.f32.mrb[0].mxu0
    %127 = vmatprep.mubr.f32.mxu0 0.0
    %128 = vmatmul.mubr.f32.gmra.mrb[0].mxu0 %v42
    %v129 = vpop.f32.mrb[0].mxu0
    %v130 = vadd.f32 0.0, %v129
    %v131 = vpop.f32.mrb[0].mxu0
    %132 = vdwg.mxu0
    %v133 = vmul.f32 %v26, %v26
    %v134 = vsel %vm44, %v133, 0.0
    %v135 = vrot.slane %v134, 4
    %v136 = vadd.f32 %v134, %v135
    %v137 = vrot.slane %v136, 2
    %v138 = vadd.f32 %v136, %v137
    %v139 = vrot.slane %v138, 1
    %v140 = vadd.f32 %v138, %v139
    %v141 = vld [vmem:[%s2] sm:$0xff]
    %v142 = vld [vmem:[%s2 + $0x8] sm:$0xff]
    %v143 = vld [vmem:[%s2 + $0x10] sm:$0xff]
    %v144 = vld [vmem:[%s2 + $0x18] sm:$0xff]
    %146 = vset.pattern.permute.xlu0 0
    %147 = vperm.xlu0 %146, %v141
    %v148 = vpop.permute.xlu0 %147
    %151 = vset.pattern.permute.xlu0 0
    %152 = vperm.xlu0 %151, %v142
    %v153 = vpop.permute.xlu0 %152
    %156 = vset.pattern.permute.xlu0 0
    %157 = vperm.xlu0 %156, %v143
    %v158 = vpop.permute.xlu0 %157
    %161 = vset.pattern.permute.xlu0 0
    %162 = vperm.xlu0 %161, %v144
    %v163 = vpop.permute.xlu0 %162
    %v165 = vadd.f32 %v148, %v140
    %v166 = vadd.f32 %v153, %v140
    %v167 = vadd.f32 %v158, %v140
    %v168 = vadd.f32 %v163, %v140
    %v169 = vmul.f32 %v115, 2.0
    %v170 = vmul.f32 %v120, 2.0
    %v171 = vmul.f32 %v125, 2.0
    %v172 = vmul.f32 %v130, 2.0
    %v173 = vsub.f32 %v165, %v169
    %v174 = vsub.f32 %v166, %v170
    %v175 = vsub.f32 %v167, %v171
    %v176 = vsub.f32 %v168, %v172
    %v177 = vmax.f32 %v173, 0.0
    %v178 = vmax.f32 %v174, 0.0
    %v179 = vmax.f32 %v175, 0.0
    %v180 = vmax.f32 %v176, 0.0
    %v181 = vld [vmem:[%s3] sm:$0xff]
    %v182 = vld [vmem:[%s3 + $0x8] sm:$0xff]
    %v183 = vld [vmem:[%s3 + $0x10] sm:$0xff]
    %v184 = vld [vmem:[%s3 + $0x18] sm:$0xff]
    %186 = vset.pattern.permute.xlu0 0
    %187 = vperm.xlu0 %186, %v181
    %v188 = vpop.permute.xlu0 %187
    %191 = vset.pattern.permute.xlu0 0
    %192 = vperm.xlu0 %191, %v182
    %v193 = vpop.permute.xlu0 %192
    %196 = vset.pattern.permute.xlu0 0
    %197 = vperm.xlu0 %196, %v183
    %v198 = vpop.permute.xlu0 %197
    %201 = vset.pattern.permute.xlu0 0
    %202 = vperm.xlu0 %201, %v184
    %v203 = vpop.permute.xlu0 %202
    %v205 = vmul.f32 %v177, %v188
    %v206 = vmul.f32 %v178, %v193
    %v207 = vmul.f32 %v179, %v198
    %v208 = vmul.f32 %v180, %v203
    %v209 = vmul.f32 %v205, 1.442695
    %v210 = vpow.pop %v209
    %v211 = vmul.f32 %v206, 1.442695
    %v212 = vpow.pop %v211
    %v213 = vmul.f32 %v207, 1.442695
    %v214 = vpow.pop %v213
    %v215 = vmul.f32 %v208, 1.442695
    %v216 = vpow.pop %v215
    %v217 = vld [vmem:[%s4] sm:$0x1]
    %v218 = vld [vmem:[#allocation2] sm:$0x1]
    %220 = vset.pattern.permute.xlu0 0
    %221 = vperm.xlu0 %220, %v218
    %v222 = vpop.permute.xlu0 %221
    %v224 = vlaneseq
    %v225 = vshrl.u32 %v224, 7
    %v226 = vsub.s32 0, %v225
    %v227 = vrot.slane %v222, %v226
    %vm228 = vcmask 261120
    %v230 = vsel %vm228, %v217, 0
    %232 = vmatprep.subr.mxu0 0.0
    %233 = vmatpush1.msra.mxu0 %v210
    %234 = vmatprep.subr.mxu0 0.0
    %235 = vmatpush1.msra.mxu0 %v212
    %236 = vmatprep.subr.mxu0 0.0
    %237 = vmatpush1.msra.mxu0 %v214
    %238 = vmatprep.subr.mxu0 0.0
    %239 = vmatpush1.msra.mxu0 %v216
    %240 = vmatprep.subr.mxu0 0.0
    %241 = vmatpush1.msra.mxu0 0.0
    %242 = vmatprep.subr.mxu0 0.0
    %243 = vmatpush1.msra.mxu0 0.0
    %244 = vmatprep.subr.mxu0 0.0
    %245 = vmatpush1.msra.mxu0 0.0
    %246 = vmatprep.subr.mxu0 0.0
    %247 = vmatpush1.msra.mxu0 0.0
    %248 = vmatprep.subr.mxu0 0.0
    %249 = vmatpush1.msra.mxu0 0.0
    %250 = vmatprep.subr.mxu0 0.0
    %251 = vmatpush1.msra.mxu0 0.0
    %252 = vmatprep.subr.mxu0 0.0
    %253 = vmatpush1.msra.mxu0 0.0
    %254 = vmatprep.subr.mxu0 0.0
    %255 = vmatpush1.msra.mxu0 0.0
    %256 = vmatprep.subr.mxu0 0.0
    %257 = vmatpush1.msra.mxu0 0.0
    %258 = vmatprep.subr.mxu0 0.0
    %259 = vmatpush1.msra.mxu0 0.0
    %260 = vmatprep.subr.mxu0 0.0
    %261 = vmatpush1.msra.mxu0 0.0
    %262 = vmatprep.subr.mxu0 0.0
    %263 = vmatpush1.msra.mxu0 0.0
    %264 = vmatprep.subr.mxu0 0.0
    %265 = vmatpush1.msra.mxu0 0.0
    %266 = vmatprep.subr.mxu0 0.0
    %267 = vmatpush1.msra.mxu0 0.0
    %268 = vmatprep.subr.mxu0 0.0
    %269 = vmatpush1.msra.mxu0 0.0
    %270 = vmatprep.subr.mxu0 0.0
    %271 = vmatpush1.msra.mxu0 0.0
    %272 = vmatprep.subr.mxu0 0.0
    %273 = vmatpush1.msra.mxu0 0.0
    %274 = vmatprep.subr.mxu0 0.0
    %275 = vmatpush1.msra.mxu0 0.0
    %276 = vmatprep.subr.mxu0 0.0
    %277 = vmatpush1.msra.mxu0 0.0
    %278 = vmatprep.subr.mxu0 0.0
    %279 = vmatpush1.msra.mxu0 0.0
    %280 = vmatprep.subr.mxu0 0.0
    %281 = vmatpush1.msra.mxu0 0.0
    %282 = vmatprep.subr.mxu0 0.0
    %283 = vmatpush1.msra.mxu0 0.0
    %284 = vmatprep.subr.mxu0 0.0
    %285 = vmatpush1.msra.mxu0 0.0
    %286 = vmatprep.subr.mxu0 0.0
    %287 = vmatpush1.msra.mxu0 0.0
    %288 = vmatprep.subr.mxu0 0.0
    %289 = vmatpush1.msra.mxu0 0.0
    %290 = vmatprep.subr.mxu0 0.0
    %291 = vmatpush1.msra.mxu0 0.0
    %292 = vmatprep.subr.mxu0 0.0
    %293 = vmatpush1.msra.mxu0 0.0
    %294 = vmatprep.subr.mxu0 0.0
    %295 = vmatpush1.msra.mxu0 0.0
    %296 = vmatprep.mubr.f32.mxu0 0.0
    %297 = vmatmul.mubr.f32.gmra.mrb[0].mxu0 %v230
    %v298 = vpop.f32.mrb[0].mxu0
    %v299 = vadd.f32 %v227, %v298
    %v300 = vpop.f32.mrb[0].mxu0
    %301 = vdwg.mxu0
    %302 = vst [vmem:[#allocation3] sm:$0x1] %v299
    // Predicated region
    $region26: #{tpu_custom_call.1} parent=1 // pred_check
      _
    $region27: #{tpu_custom_call.1} parent=1 // pred_check_branch
      %304 = sbr.rel (0) target = $region29
    $region28: #{tpu_custom_call.1} parent=1 // pred_region
      %s306 = ssub.s32 16, 16
      %307 = vsyncadd [#allocation4], %s306
      %s309 = sshll.u32 [#allocation3], 4
      %s310 = int_to_ptr.vmem [resolvable:$true] %s309
      %312 = dma.vmem_to_hbm [thread:$0]  %s310, 16, %s6, [#allocation4]
    $region29: #{tpu_custom_call.1} parent=1 // pred_fallthru
      _
    // Predicated region
    $region30: #{tpu_custom_call.1} parent=1 // pred_check
      _
    $region31: #{tpu_custom_call.1} parent=1 // pred_check_branch
      %314 = sbr.rel (0) target = $region33
    $region32: #{tpu_custom_call.1} parent=1 // pred_region
      %315 = dma.done [#allocation4], 16
    $region33: #{tpu_custom_call.1} parent=1 // pred_fallthru
      _
    %316 = vsyncpa [#allocation4], 1

</llo_original>
